<compile_context>
chip_gen: v7x
topology: tpu7x:2x2x1
jax: 0.10.0
libtpu: 0.0.40
codegen_flags: <defaults>
</compile_context>

<pallas_src>
import functools

import jax
import jax.numpy as jnp
from jax import lax
from jax.experimental import pallas as pl
from jax.experimental.pallas import tpu as pltpu

_LANES = 128           # lane width -> unmasked, lane-dense stores
_SUBLANES = 8          # f32 sublane tile
_MAX_BLOCK_ROWS = 512  # 512 x 128 f32 = 256 KiB per block

# Plain Python ints/floats only: the kernel body must not capture device arrays.
_MANTISSA_BITS = 0x007FFFFF   # low 23 bits
_EXP_TWO_FOUR = 0x40000000    # float32 exponent pattern for [2.0, 4.0)


def _bits_to_uniform(bits):
    """Map 32-bit random integers to uniform float32 in [-1.0, 1.0).

    Keep 23 mantissa bits, OR in the [2, 4) exponent, bitcast to f32, subtract
    3.0.  Endpoints match torch.rand()*2-1 ([-1, 1)); granularity is 2^-22.
    """
    mantissa = bits & _MANTISSA_BITS
    pattern = mantissa | _EXP_TWO_FOUR
    u24 = lax.bitcast_convert_type(pattern, jnp.float32)   # uniform in [2, 4)
    return u24 - 3.0


def _uniform_from_seed_kernel(seed_ref, o_ref):
    """Write-only kernel: hardware PRNG bits -> uniform [-1, 1)."""
    # Distinct stream per grid step (multi-block grids stay decorrelated).
    pltpu.prng_seed(seed_ref[0], pl.program_id(0))
    bits = pltpu.prng_random_bits(o_ref.shape)
    o_ref[...] = _bits_to_uniform(bits)


def _uniform_from_bits_kernel(bits_ref, o_ref):
    """Fallback kernel: host-generated bits -> uniform [-1, 1)."""
    o_ref[...] = _bits_to_uniform(bits_ref[...])


def _slab_geometry(batch):
    """(rows, block_rows) of the lane-dense f32 slab holding >= 2*batch values."""
    rows_needed = max(1, pl.cdiv(2 * batch, _LANES))
    if rows_needed <= _MAX_BLOCK_ROWS:
        rows = max(_SUBLANES, pl.cdiv(rows_needed, _SUBLANES) * _SUBLANES)
        return rows, rows                       # single grid step
    rows = pl.cdiv(rows_needed, _MAX_BLOCK_ROWS) * _MAX_BLOCK_ROWS
    return rows, _MAX_BLOCK_ROWS


@functools.partial(jax.jit, static_argnames=("batch",))
def _forward_hw_prng(key, *, batch):
    """Uniform (batch, 2) via the in-kernel hardware PRNG (preferred path)."""
    rows, block_rows = _slab_geometry(batch)
    seed = jax.random.randint(key, (1,), 0, 2**31 - 1, dtype=jnp.int32)
    slab = pl.pallas_call(
        _uniform_from_seed_kernel,
        out_shape=jax.ShapeDtypeStruct((rows, _LANES), jnp.float32),
        grid_spec=pltpu.PrefetchScalarGridSpec(
            num_scalar_prefetch=1,              # seed lives in SMEM
            grid=(rows // block_rows,),
            in_specs=[],
            out_specs=pl.BlockSpec((block_rows, _LANES),
                                   lambda i, seed_ref: (i, 0)),
        ),
        compiler_params=pltpu.CompilerParams(
            dimension_semantics=("parallel",)),
    )(seed)
    # Packed slab -> (batch, 2): metadata-only reshape + tiny contiguous slice.
    return slab.reshape(-1)[: 2 * batch].reshape(batch, 2)


@functools.partial(jax.jit, static_argnames=("batch",))
def _forward_portable(key, *, batch):
    """Fallback: jax.random.bits slab through the same packed-layout kernel."""
    rows, block_rows = _slab_geometry(batch)
    bits = jax.random.bits(key, (rows, _LANES), dtype=jnp.uint32)
    slab = pl.pallas_call(
        _uniform_from_bits_kernel,
        out_shape=jax.ShapeDtypeStruct((rows, _LANES), jnp.float32),
        grid=(rows // block_rows,),
        in_specs=[pl.BlockSpec((block_rows, _LANES), lambda i: (i, 0))],
        out_specs=pl.BlockSpec((block_rows, _LANES), lambda i: (i, 0)),
        compiler_params=pltpu.CompilerParams(
            dimension_semantics=("parallel",)),
    )(bits)
    return slab.reshape(-1)[: 2 * batch].reshape(batch, 2)


_HW_PRNG_OK = None


def _hw_prng_available():
    """Probe once whether pltpu.prng_* lowers and runs in this environment."""
    global _HW_PRNG_OK
    if _HW_PRNG_OK is None:
        try:
            jax.block_until_ready(
                _forward_hw_prng(jax.random.PRNGKey(0), batch=1))
            _HW_PRNG_OK = True
        except Exception:
            # TODO(synk): drop the portable fallback once every target runtime
            # (including interpret/emulation) lowers pltpu.prng_random_bits.
            _HW_PRNG_OK = False
    return _HW_PRNG_OK


def random_net_forward(x, key):
    """Pallas equivalent of RandomNet.forward: uniform [-1, 1) of shape (B, 2)."""
    batch = x.shape[0]
    if _hw_prng_available():
        return _forward_hw_prng(key, batch=batch)
    return _forward_portable(key, batch=batch)


if __name__ == "__main__":
    root = jax.random.PRNGKey(0)
    data_key, rand_key = jax.random.split(root)

    # Small NCHW input consistent with a conv-net style forward signature.
    x = jax.random.normal(data_key, (2, 4, 16, 16), dtype=jnp.float32)

    out = random_net_forward(x, rand_key)
    out = jax.block_until_ready(out)

    assert out.shape == (x.shape[0], 2), out.shape
    assert out.dtype == jnp.float32
    assert bool(jnp.all(out >= -1.0)) and bool(jnp.all(out < 1.0))

    print("KERNEL_OK")
</pallas_src>

<mosaic_0001>
module attributes {stable_mosaic.version = 11 : i64} {
  func.func @_uniform_from_seed_kernel(%arg0: i32, %arg1: memref<1xi32, #tpu.memory_space<smem>>, %arg2: memref<8x128xf32, #tpu.memory_space<vmem>>) attributes {dimension_semantics = [#tpu.dimension_semantics<parallel>], iteration_bounds = array<i64: 1>, scalar_prefetch = 1 : i64, scratch_operands = 0 : i64, tpu.core_type = #tpu.core_type<tc>, window_params = [{transform_indices = @transform_0, window_bounds = array<i64: 8, 128>}]} {
    %c0 = arith.constant 0 : index
    %0 = memref.load %arg1[%c0] : memref<1xi32, #tpu.memory_space<smem>>
    "tpu.prng_set_seed_32"(%0, %arg0) : (i32, i32) -> ()
    %1 = "tpu.prng_random_bits"() : () -> vector<8x128xi32>
    %c8388607_i32 = arith.constant 8388607 : i32
    %2 = vector.broadcast %c8388607_i32 : i32 to vector<8x128xi32>
    %3 = arith.andi %1, %2 : vector<8x128xi32>
    %c1073741824_i32 = arith.constant 1073741824 : i32
    %4 = vector.broadcast %c1073741824_i32 : i32 to vector<8x128xi32>
    %5 = arith.ori %3, %4 : vector<8x128xi32>
    %6 = tpu.bitcast %5 : vector<8x128xi32> -> vector<8x128xf32>
    %cst = arith.constant 3.000000e+00 : f32
    %7 = vector.broadcast %cst : f32 to vector<8x128xf32>
    %8 = arith.subf %6, %7 : vector<8x128xf32>
    %c0_0 = arith.constant 0 : index
    %c0_1 = arith.constant 0 : index
    %9 = vector.load %arg2[%c0_0, %c0_1] : memref<8x128xf32, #tpu.memory_space<vmem>>, vector<8x128xf32>
    tpu.vector_store %arg2[%c0_0, %c0_1], %8 {strides = array<i32>} : memref<8x128xf32, #tpu.memory_space<vmem>>, vector<8x128xf32>,
    return
  }
  func.func @transform_0(%arg0: i32, %arg1: memref<1xi32, #tpu.memory_space<smem>>) -> (i32, i32) {
    %c0_i32 = arith.constant 0 : i32
    %c0_i32_0 = arith.constant 0 : i32
    return %arg0, %c0_i32 : i32, i32
  }
}

module attributes {stable_mosaic.version = 11 : i64} {
  func.func @_uniform_from_bits_kernel(%arg0: i32, %arg1: memref<8x128xi32, #tpu.memory_space<vmem>>, %arg2: memref<8x128xf32, #tpu.memory_space<vmem>>) attributes {dimension_semantics = [#tpu.dimension_semantics<parallel>], iteration_bounds = array<i64: 1>, scalar_prefetch = 0 : i64, scratch_operands = 0 : i64, tpu.core_type = #tpu.core_type<tc>, window_params = [{transform_indices = @transform_0, window_bounds = array<i64: 8, 128>}, {transform_indices = @transform_1, window_bounds = array<i64: 8, 128>}]} {
    %c0 = arith.constant 0 : index
    %c0_0 = arith.constant 0 : index
    %0 = vector.load %arg1[%c0, %c0_0] : memref<8x128xi32, #tpu.memory_space<vmem>>, vector<8x128xi32>
    %c8388607_i32 = arith.constant 8388607 : i32
    %1 = vector.broadcast %c8388607_i32 : i32 to vector<8x128xi32>
    %2 = arith.andi %0, %1 : vector<8x128xi32>
    %c1073741824_i32 = arith.constant 1073741824 : i32
    %3 = vector.broadcast %c1073741824_i32 : i32 to vector<8x128xi32>
    %4 = arith.ori %2, %3 : vector<8x128xi32>
    %5 = tpu.bitcast %4 : vector<8x128xi32> -> vector<8x128xf32>
    %cst = arith.constant 3.000000e+00 : f32
    %6 = vector.broadcast %cst : f32 to vector<8x128xf32>
    %7 = arith.subf %5, %6 : vector<8x128xf32>
    %c0_1 = arith.constant 0 : index
    %c0_2 = arith.constant 0 : index
    %8 = vector.load %arg2[%c0_1, %c0_2] : memref<8x128xf32, #tpu.memory_space<vmem>>, vector<8x128xf32>
    tpu.vector_store %arg2[%c0_1, %c0_2], %7 {strides = array<i32>} : memref<8x128xf32, #tpu.memory_space<vmem>>, vector<8x128xf32>,
    return
  }
  func.func @transform_0(%arg0: i32) -> (i32, i32) {
    %c0_i32 = arith.constant 0 : i32
    %c0_i32_0 = arith.constant 0 : i32
    return %arg0, %c0_i32 : i32, i32
  }
  func.func @transform_1(%arg0: i32) -> (i32, i32) {
    %c0_i32 = arith.constant 0 : i32
    %c0_i32_0 = arith.constant 0 : i32
    return %arg0, %c0_i32 : i32, i32
  }
}

</mosaic_0001>

<llo_original>
// kernel: _forward_hw_prng.1
$region0: #{_forward_hw_prng.1}
  #allocation0 [shape = 'u32[]', space=smem, size = 0x4, offset = 0x4, fixed_abs, tag = 'smem constant byte address 0x4 - core index']
  #allocation1 [shape = 'u32[144,128]{1,0:T(1,128)}', space=vmem, size = 0x12000, scoped, tag = 'internal scratch']
  #allocation2 [shape = 's32[1]{0}', space=sflag, size = 0x4, scoped, tag = 'scoped memory for _forward_hw_prng.1']
  #allocation3 [shape = 's32[1]{0:T(128)S(6)}', space=smem, size = 0x200, scoped, tag = 'prefetched SMEM operand 0']
  %s0 = inlined_call_operand.<no memory space> [shape: s32[1], index: 0, kind: input, shape index: {}]
  %s1 = inlined_call_operand.vmem [shape: f32[8,128], index: 1, kind: output, shape index: {}]
  %s2 = sld [smem:[#allocation0]]
  $region10: #{_forward_hw_prng.1} parent=0
    _
  %s4 = ssub.s32 1, %s2
  %s5 = scalar_select 0, %s4, %s2
  %6 = sst [smem:[#allocation3]] %s0
  %s7 = sld [smem:[#allocation3]]
  %v8 = vlaneseq
  %v9 = vstv 0
  %v10 = vstv %s7
  %v11 = vxor.u32 %v9, %v10
  %v12 = vxor.u32 %v11, 466688986
  %v13 = vadd.s32 %v8, %v9
  %v14 = vadd.s32 %v8, %v10
  %v15 = vadd.s32 %v13, %v14
  %v16 = vshll.u32 %v14, 13
  %v17 = vshrl.u32 %v14, 19
  %v18 = vor.u32 %v16, %v17
  %v19 = vxor.u32 %v15, %v18
  %v20 = vadd.s32 %v15, %v19
  %v21 = vshll.u32 %v19, 15
  %v22 = vshrl.u32 %v19, 17
  %v23 = vor.u32 %v21, %v22
  %v24 = vxor.u32 %v20, %v23
  %v25 = vadd.s32 %v20, %v24
  %v26 = vshll.u32 %v24, 26
  %v27 = vshrl.u32 %v24, 6
  %v28 = vor.u32 %v26, %v27
  %v29 = vxor.u32 %v25, %v28
  %v30 = vadd.s32 %v25, %v29
  %v31 = vshll.u32 %v29, 6
  %v32 = vshrl.u32 %v29, 26
  %v33 = vor.u32 %v31, %v32
  %v34 = vxor.u32 %v30, %v33
  %v35 = vadd.s32 %v30, %v10
  %v36 = vadd.s32 %v34, %v12
  %v37 = vadd.s32 %v36, 1
  %v38 = vadd.s32 %v35, %v37
  %v39 = vshll.u32 %v37, 17
  %v40 = vshrl.u32 %v37, 15
  %v41 = vor.u32 %v39, %v40
  %v42 = vxor.u32 %v38, %v41
  %v43 = vadd.s32 %v38, %v42
  %v44 = vshll.u32 %v42, 29
  %v45 = vshrl.u32 %v42, 3
  %v46 = vor.u32 %v44, %v45
  %v47 = vxor.u32 %v43, %v46
  %v48 = vadd.s32 %v43, %v47
  %v49 = vshll.u32 %v47, 16
  %v50 = vshrl.u32 %v47, 16
  %v51 = vor.u32 %v49, %v50
  %v52 = vxor.u32 %v48, %v51
  %v53 = vadd.s32 %v48, %v52
  %v54 = vshll.u32 %v52, 24
  %v55 = vshrl.u32 %v52, 8
  %v56 = vor.u32 %v54, %v55
  %v57 = vxor.u32 %v53, %v56
  %v58 = vadd.s32 %v53, %v12
  %v59 = vadd.s32 %v57, %v9
  %v60 = vadd.s32 %v59, 2
  %v61 = vadd.s32 %v58, %v60
  %v62 = vshll.u32 %v60, 13
  %v63 = vshrl.u32 %v60, 19
  %v64 = vor.u32 %v62, %v63
  %v65 = vxor.u32 %v61, %v64
  %v66 = vadd.s32 %v61, %v65
  %v67 = vshll.u32 %v65, 15
  %v68 = vshrl.u32 %v65, 17
  %v69 = vor.u32 %v67, %v68
  %v70 = vxor.u32 %v66, %v69
  %v71 = vadd.s32 %v66, %v70
  %v72 = vshll.u32 %v70, 26
  %v73 = vshrl.u32 %v70, 6
  %v74 = vor.u32 %v72, %v73
  %v75 = vxor.u32 %v71, %v74
  %v76 = vadd.s32 %v71, %v75
  %v77 = vshll.u32 %v75, 6
  %v78 = vshrl.u32 %v75, 26
  %v79 = vor.u32 %v77, %v78
  %v80 = vxor.u32 %v76, %v79
  %v81 = vadd.s32 %v76, %v9
  %v82 = vadd.s32 %v80, %v10
  %v83 = vadd.s32 %v82, 3
  %v84 = vadd.s32 %v81, %v83
  %v85 = vshll.u32 %v83, 17
  %v86 = vshrl.u32 %v83, 15
  %v87 = vor.u32 %v85, %v86
  %v88 = vxor.u32 %v84, %v87
  %v89 = vadd.s32 %v84, %v88
  %v90 = vshll.u32 %v88, 29
  %v91 = vshrl.u32 %v88, 3
  %v92 = vor.u32 %v90, %v91
  %v93 = vxor.u32 %v89, %v92
  %v94 = vadd.s32 %v89, %v93
  %v95 = vshll.u32 %v93, 16
  %v96 = vshrl.u32 %v93, 16
  %v97 = vor.u32 %v95, %v96
  %v98 = vxor.u32 %v94, %v97
  %v99 = vadd.s32 %v94, %v98
  %v100 = vshll.u32 %v98, 24
  %v101 = vshrl.u32 %v98, 8
  %v102 = vor.u32 %v100, %v101
  %v103 = vxor.u32 %v99, %v102
  %v104 = vadd.s32 %v99, %v10
  %v105 = vadd.s32 %v103, %v12
  %v106 = vadd.s32 %v105, 4
  %v107 = vadd.s32 %v104, %v106
  %v108 = vshll.u32 %v106, 13
  %v109 = vshrl.u32 %v106, 19
  %v110 = vor.u32 %v108, %v109
  %v111 = vxor.u32 %v107, %v110
  %v112 = vadd.s32 %v107, %v111
  %v113 = vshll.u32 %v111, 15
  %v114 = vshrl.u32 %v111, 17
  %v115 = vor.u32 %v113, %v114
  %v116 = vxor.u32 %v112, %v115
  %v117 = vadd.s32 %v112, %v116
  %v118 = vshll.u32 %v116, 26
  %v119 = vshrl.u32 %v116, 6
  %v120 = vor.u32 %v118, %v119
  %v121 = vxor.u32 %v117, %v120
  %v122 = vadd.s32 %v117, %v121
  %v123 = vshll.u32 %v121, 6
  %v124 = vshrl.u32 %v121, 26
  %v125 = vor.u32 %v123, %v124
  %v126 = vxor.u32 %v122, %v125
  %v127 = vadd.s32 %v122, %v12
  %v128 = vadd.s32 %v126, %v9
  %v129 = vadd.s32 %v128, 5
  %v130 = vxor.u32 %v127, %v129
  %131 = set.rngseed %v130
  %v132 = vrng
  %v133 = vand.u32 %v132, 8388607
  %v134 = vor.u32 %v133, 1073741824
  %v136 = vsub.f32 %v134, 3.0
  %137 = vst [vmem:[%s1] sm:$0xff] %v136
  // Predicated region
  $region2: #{_forward_hw_prng.1} parent=0 // pred_check
    _
  $region3: #{_forward_hw_prng.1} parent=0 // pred_check_branch
    %139 = sbr.rel (0) target = $region5
  $region4: #{_forward_hw_prng.1} parent=0 // pred_region
    _
  $region5: #{_forward_hw_prng.1} parent=0 // pred_fallthru
    _
  // Predicated region
  $region6: #{_forward_hw_prng.1} parent=0 // pred_check
    _
  $region7: #{_forward_hw_prng.1} parent=0 // pred_check_branch
    %141 = sbr.rel (0) target = $region9
  $region8: #{_forward_hw_prng.1} parent=0 // pred_region
    _
  $region9: #{_forward_hw_prng.1} parent=0 // pred_fallthru
    _

// kernel: _forward_portable.1
$region0: #{_forward_portable.1}
  #allocation0 [shape = 'u32[]', space=smem, size = 0x4, offset = 0x4, fixed_abs, tag = 'smem constant byte address 0x4 - core index']
  #allocation1 [shape = 'u32[144,128]{1,0:T(1,128)}', space=vmem, size = 0x12000, scoped, tag = 'internal scratch']
  %s0 = inlined_call_operand.vmem [shape: u32[8,128], index: 0, kind: input, shape index: {}]
  %s1 = inlined_call_operand.vmem [shape: f32[8,128], index: 1, kind: output, shape index: {}]
  %s2 = sld [smem:[#allocation0]]
  $region14: #{_forward_portable.1} parent=0
    _
  %s4 = ssub.s32 1, %s2
  %s5 = scalar_select 0, %s4, %s2
  // Predicated region
  $region2: #{_forward_portable.1} parent=0 // pred_check
    _
  $region3: #{_forward_portable.1} parent=0 // pred_check_branch
    %7 = sbr.rel (0) target = $region5
  $region4: #{_forward_portable.1} parent=0 // pred_region
    _
  $region5: #{_forward_portable.1} parent=0 // pred_fallthru
    _
  %v8 = vld [vmem:[%s0] sm:$0xff]
  %v9 = vand.u32 %v8, 8388607
  %v10 = vor.u32 %v9, 1073741824
  %v12 = vsub.f32 %v10, 3.0
  %13 = vst [vmem:[%s1] sm:$0xff] %v12
  // Predicated region
  $region6: #{_forward_portable.1} parent=0 // pred_check
    _
  $region7: #{_forward_portable.1} parent=0 // pred_check_branch
    %15 = sbr.rel (0) target = $region9
  $region8: #{_forward_portable.1} parent=0 // pred_region
    _
  $region9: #{_forward_portable.1} parent=0 // pred_fallthru
    _
  // Predicated region
  $region10: #{_forward_portable.1} parent=0 // pred_check
    _
  $region11: #{_forward_portable.1} parent=0 // pred_check_branch
    %17 = sbr.rel (0) target = $region13
  $region12: #{_forward_portable.1} parent=0 // pred_region
    _
  $region13: #{_forward_portable.1} parent=0 // pred_fallthru
    _

</llo_original>
